<compile_context>
chip_gen: v5e
topology: v5e:2x2
jax: 0.10.0
libtpu: 0.0.40
codegen_flags: <defaults>
</compile_context>

<pallas_src>
import functools

import jax
import jax.numpy as jnp
from jax.experimental import pallas as pl
from jax.experimental.pallas import tpu as pltpu


LANE = 128      # lane width of a vreg (last-dim granularity)
SUBLANE = 8     # sublane count (second-to-last-dim granularity, f32)

VMEM_LIMIT_BYTES = 48 * 1024 * 1024   # scoped VMEM limit (fits v7x 64 MiB physical)
VMEM_TILE_BUDGET = 32 * 1024 * 1024   # budget for tile working set (leaves slack)
MAX_TN = 1024                         # max output-lane tile
MAX_TK = 2048                         # max K (input-feature) tile
SMALL_DISPATCH_FLOPS = 1_000_000      # below this, plain XLA is faster than launch


def _round_up(x, m):
    return ((x + m - 1) // m) * m


def _ceil_div(a, b):
    return -(-a // b)


def _pick_tile(total, max_tile):
    """Largest multiple of LANE <= max_tile that divides `total` (total % LANE == 0)."""
    t = min(total, max_tile)
    t = max(LANE, (t // LANE) * LANE)
    while total % t != 0:
        t -= LANE
    return t


# --------------------------------------------------------------------------- #
# Kernels
# --------------------------------------------------------------------------- #
def _linear_kernel(x_ref, w_ref, b_ref, o_ref):
    """Single K-block: one MXU matmul (f32 accumulation) + f32 bias add."""
    x = x_ref[...].astype(w_ref.dtype)                          # in-kernel cast (VPU)
    acc = jnp.dot(x, w_ref[...], preferred_element_type=jnp.float32)
    o_ref[...] = (acc + b_ref[...].astype(jnp.float32)).astype(o_ref.dtype)


def _linear_kernel_ktiled(x_ref, w_ref, b_ref, o_ref, acc_ref):
    """K-tiled: accumulate partial products in a VMEM f32 scratch."""
    k = pl.program_id(2)

    @pl.when(k == 0)
    def _():
        acc_ref[...] = jnp.zeros_like(acc_ref)

    x = x_ref[...].astype(w_ref.dtype)
    acc_ref[...] += jnp.dot(x, w_ref[...], preferred_element_type=jnp.float32)

    @pl.when(k == pl.num_programs(2) - 1)
    def _():
        o_ref[...] = (acc_ref[...] + b_ref[...].astype(jnp.float32)).astype(o_ref.dtype)


# --------------------------------------------------------------------------- #
# One-time parameter prep (hoisted out of the hot path)
# --------------------------------------------------------------------------- #
def prepare_params(weight, bias, compute_dtype=jnp.bfloat16):
    """weight: [out, in] (nn.Linear layout), bias: [out].

    Returns (w_t [in, out_pad] in compute_dtype, b2d [1, out_pad] f32, out_size).
    Padded columns are zero so the padded matmul is exact on the real columns.
    """
    out_size, in_size = weight.shape
    out_pad = _round_up(out_size, LANE)
    w_t = jnp.zeros((in_size, out_pad), dtype=compute_dtype)
    w_t = w_t.at[:, :out_size].set(weight.T.astype(compute_dtype))
    b2d = jnp.zeros((1, out_pad), dtype=jnp.float32)
    b2d = b2d.at[:, :out_size].set(bias.astype(jnp.float32))
    return w_t, b2d, out_size


# --------------------------------------------------------------------------- #
# Tile selection helpers (all static: derived from shapes / dtypes)
# --------------------------------------------------------------------------- #
def _tb_vmem_cap(tk, tn, x_itemsize, w_itemsize, o_itemsize, nk):
    """Max batch tile so double-buffered tiles (+ accumulator) fit the budget."""
    fixed = 2 * (tk * tn * w_itemsize + tn * 4)                       # weight + bias bufs
    per_row = 2 * (tk * x_itemsize + tn * o_itemsize)                 # x + out bufs
    if nk > 1:
        per_row += tn * 4                                             # f32 accumulator
    cap = (VMEM_TILE_BUDGET - fixed) // max(per_row, 1)
    return max(SUBLANE, (cap // SUBLANE) * SUBLANE)


def _batch_tiles(b8, max_tb):
    """Pick (tb, nsteps): bounded padding (<= 8 rows/step), >=2 steps when B>=16."""
    max_tb = max(SUBLANE, (max_tb // SUBLANE) * SUBLANE)
    nsteps = max(_ceil_div(b8, max_tb), 2 if b8 >= 2 * SUBLANE else 1)
    tb = _round_up(_ceil_div(b8, nsteps), SUBLANE)
    return tb, nsteps


# --------------------------------------------------------------------------- #
# Forward pass
# --------------------------------------------------------------------------- #
@functools.partial(jax.jit, static_argnames=("out_size", "batch_tile", "force_pallas"))
def simple_classifier_forward(x, w_t, b2d, *, out_size, batch_tile=1024,
                              force_pallas=False):
    """y = x @ weight.T + bias  (PyTorch nn.Linear semantics), f32 output.

    x:   [B, input_size]
    w_t: [input_size, out_pad] (pre-transposed, lane-padded; from prepare_params)
    b2d: [1, out_pad] float32
    """
    B, in_size = x.shape
    out_pad = w_t.shape[1]
    cdtype = w_t.dtype

    # Tiny problems: XLA's fused GEMM+bias beats Pallas launch/DMA-setup overhead.
    if not force_pallas and 2 * B * in_size * out_pad < SMALL_DISPATCH_FLOPS:
        y = jnp.dot(x.astype(cdtype), w_t, preferred_element_type=jnp.float32) + b2d
        return y[:, :out_size].astype(jnp.float32)

    # ---- tile selection ----------------------------------------------------
    tn = out_pad if out_pad <= MAX_TN else _pick_tile(out_pad, MAX_TN)
    nn = out_pad // tn
    if in_size <= MAX_TK or in_size % LANE != 0:
        tk, nk = in_size, 1                       # single K block (full-dim exemption)
    else:
        tk = _pick_tile(in_size, MAX_TK)
        nk = in_size // tk

    x_itemsize = jnp.dtype(x.dtype).itemsize
    w_itemsize = jnp.dtype(cdtype).itemsize

    b8 = _round_up(B, SUBLANE)
    tb_cap = _tb_vmem_cap(tk, tn, x_itemsize, w_itemsize, 4, nk)
    tb, nb = _batch_tiles(b8, min(batch_tile, tb_cap))
    b_pad = tb * nb

    # Bounded batch pad (<= 8 rows per grid step); fuse the bf16 cast into it.
    if b_pad != B:
        xin = x if x.dtype == cdtype else x.astype(cdtype)
        xin = jnp.pad(xin, ((0, b_pad - B), (0, 0)))
    else:
        xin = x                                   # cast happens in-kernel (no extra pass)

    kernel = _linear_kernel if nk == 1 else _linear_kernel_ktiled
    scratch = [] if nk == 1 else [pltpu.VMEM((tb, tn), jnp.float32)]

    # Advisory cost estimate for XLA's scheduler.
    w_passes = nb if (nn * nk) > 1 else 1
    bytes_accessed = (b_pad * in_size * jnp.dtype(xin.dtype).itemsize
                      + in_size * out_pad * w_itemsize * w_passes
                      + out_pad * 4
                      + b_pad * out_pad * 4)
    cost = pl.CostEstimate(flops=2 * b_pad * in_size * out_pad,
                           transcendentals=0,
                           bytes_accessed=bytes_accessed)

    y_pad = pl.pallas_call(
        kernel,
        out_shape=jax.ShapeDtypeStruct((b_pad, out_pad), jnp.float32),
        grid_spec=pltpu.PrefetchScalarGridSpec(
            num_scalar_prefetch=0,
            grid=(nb, nn, nk),
            in_specs=[
                # x: tiled over batch and K, pipelined HBM->VMEM.
                pl.BlockSpec((tb, tk), lambda i, j, k: (i, k)),
                # weight: tiled over K and N (single resident block for small layers).
                pl.BlockSpec((tk, tn), lambda i, j, k: (k, j)),
                # bias: tiled over N only.
                pl.BlockSpec((1, tn), lambda i, j, k: (0, j)),
            ],
            out_specs=pl.BlockSpec((tb, tn), lambda i, j, k: (i, j)),
            scratch_shapes=scratch,
        ),
        compiler_params=pltpu.CompilerParams(
            # batch / out-lane tiles independent -> parallel (megacore on v7x);
            # K is a reduction -> arbitrary (innermost, accumulator-friendly).
            dimension_semantics=("parallel", "parallel", "arbitrary"),
            vmem_limit_bytes=VMEM_LIMIT_BYTES,
        ),
        cost_estimate=cost,
    )(xin, w_t, b2d)

    # Strip batch and output-lane padding.
    # TODO(synk): for a fused pipeline, consume y_pad directly downstream
    # (mask padded classes at softmax/argmax) to skip this extra HBM pass.
    return y_pad[:B, :out_size]


if __name__ == "__main__":
    # Shapes consistent with the module:
    # input_size = len(features[0]) -> 32, output_size = len(set(labels)) -> 4
    input_size = 32
    output_size = 4

    key = jax.random.PRNGKey(0)
    kx, kw, kb, kx2 = jax.random.split(key, 4)

    # Deterministic parameter init mimicking nn.Linear's uniform(-1/sqrt(in), 1/sqrt(in))
    bound = 1.0 / jnp.sqrt(jnp.float32(input_size))
    weight = jax.random.uniform(kw, (output_size, input_size),
                                minval=-bound, maxval=bound, dtype=jnp.float32)
    bias = jax.random.uniform(kb, (output_size,),
                              minval=-bound, maxval=bound, dtype=jnp.float32)

    # ---- check 1: small batch, f32 compute path --------------------------------
    batch = 8
    x = jax.random.normal(kx, (batch, input_size), dtype=jnp.float32)
    w_t32, b2d32, out_size = prepare_params(weight, bias, compute_dtype=jnp.float32)
    y = simple_classifier_forward(x, w_t32, b2d32, out_size=out_size, force_pallas=True)
    jax.block_until_ready(y)
    y_ref = x @ weight.T + bias
    assert y.shape == (batch, output_size)
    assert jnp.allclose(y, y_ref, atol=2e-2, rtol=2e-2)

    # ---- check 2: larger batch (multi-step grid + bounded pad), bf16 compute ----
    batch2 = 200
    x2 = jax.random.normal(kx2, (batch2, input_size), dtype=jnp.float32)
    w_t16, b2d16, _ = prepare_params(weight, bias, compute_dtype=jnp.bfloat16)
    y2 = simple_classifier_forward(x2, w_t16, b2d16, out_size=out_size, force_pallas=True)
    jax.block_until_ready(y2)
    y2_ref = x2 @ weight.T + bias
    assert y2.shape == (batch2, output_size)
    assert jnp.allclose(y2, y2_ref, atol=5e-2, rtol=5e-2)

    print("KERNEL_OK")
</pallas_src>

<mosaic_0001>
module attributes {stable_mosaic.version = 11 : i64} {
  func.func @_linear_kernel(%arg0: i32, %arg1: i32, %arg2: i32, %arg3: memref<8x32xf32, #tpu.memory_space<vmem>>, %arg4: memref<32x128xf32, #tpu.memory_space<vmem>>, %arg5: memref<1x128xf32, #tpu.memory_space<vmem>>, %arg6: memref<8x128xf32, #tpu.memory_space<vmem>>) attributes {dimension_semantics = [#tpu.dimension_semantics<parallel>, #tpu.dimension_semantics<parallel>, #tpu.dimension_semantics<arbitrary>], iteration_bounds = array<i64: 1, 1, 1>, scalar_prefetch = 0 : i64, scratch_operands = 0 : i64, tpu.core_type = #tpu.core_type<tc>, window_params = [{transform_indices = @transform_0, window_bounds = array<i64: 8, 32>}, {transform_indices = @transform_1, window_bounds = array<i64: 32, 128>}, {transform_indices = @transform_2, window_bounds = array<i64: 1, 128>}, {transform_indices = @transform_3, window_bounds = array<i64: 8, 128>}]} {
    %c0 = arith.constant 0 : index
    %c0_0 = arith.constant 0 : index
    %0 = vector.load %arg3[%c0, %c0_0] : memref<8x32xf32, #tpu.memory_space<vmem>>, vector<8x32xf32>
    %c0_1 = arith.constant 0 : index
    %c0_2 = arith.constant 0 : index
    %1 = vector.load %arg4[%c0_1, %c0_2] : memref<32x128xf32, #tpu.memory_space<vmem>>, vector<32x128xf32>
    %cst = arith.constant dense<0.000000e+00> : vector<8x128xf32>
    %2 = tpu.matmul %0, %1, %cst {dimension_numbers = #tpu.dot_dimension_numbers<[1], [0], [0], [1], [0, 0, 1, 1], [], []>} : vector<8x32xf32>, vector<32x128xf32>, vector<8x128xf32> -> vector<8x128xf32>
    %c0_3 = arith.constant 0 : index
    %c0_4 = arith.constant 0 : index
    %3 = vector.load %arg5[%c0_3, %c0_4] : memref<1x128xf32, #tpu.memory_space<vmem>>, vector<1x128xf32>
    %4 = vector.broadcast %3 : vector<1x128xf32> to vector<8x128xf32>
    %5 = arith.addf %2, %4 : vector<8x128xf32>
    %c0_5 = arith.constant 0 : index
    %c0_6 = arith.constant 0 : index
    %6 = vector.load %arg6[%c0_5, %c0_6] : memref<8x128xf32, #tpu.memory_space<vmem>>, vector<8x128xf32>
    tpu.vector_store %arg6[%c0_5, %c0_6], %5 {strides = array<i32>} : memref<8x128xf32, #tpu.memory_space<vmem>>, vector<8x128xf32>,
    return
  }
  func.func @transform_0(%arg0: i32, %arg1: i32, %arg2: i32) -> (i32, i32) {
    %c0_i32 = arith.constant 0 : i32
    return %arg0, %arg2 : i32, i32
  }
  func.func @transform_1(%arg0: i32, %arg1: i32, %arg2: i32) -> (i32, i32) {
    %c0_i32 = arith.constant 0 : i32
    return %arg2, %arg1 : i32, i32
  }
  func.func @transform_2(%arg0: i32, %arg1: i32, %arg2: i32) -> (i32, i32) {
    %c0_i32 = arith.constant 0 : i32
    %c0_i32_0 = arith.constant 0 : i32
    return %c0_i32, %arg1 : i32, i32
  }
  func.func @transform_3(%arg0: i32, %arg1: i32, %arg2: i32) -> (i32, i32) {
    %c0_i32 = arith.constant 0 : i32
    return %arg0, %arg1 : i32, i32
  }
}

</mosaic_0001>

<llo_original>
// kernel: simple_classifier_forward.1
$region0: #{simple_classifier_forward.1}
  #allocation0 [shape = 'u32[]', space=smem, size = 0x4, offset = 0x4, fixed_abs, tag = 'smem constant byte address 0x4 - core index']
  #allocation1 [shape = 'u32[72,128]{1,0:T(1,128)}', space=vmem, size = 0x9000, scoped, tag = 'internal scratch']
  %s0 = inlined_call_operand.hbm [shape: f32[8,32], index: 0, kind: input, shape index: {}]
  %s1 = inlined_call_operand.hbm [shape: f32[32,128], index: 1, kind: input, shape index: {}]
  %s2 = inlined_call_operand.vmem [shape: f32[1,128], index: 2, kind: input, shape index: {}]
  %s3 = inlined_call_operand.vmem [shape: f32[8,128], index: 3, kind: output, shape index: {}]
  %s4 = sld [smem:[#allocation0]]
  $region30: #{simple_classifier_forward.1} parent=0
    _
  %s6 = ssub.s32 1, %s4
  %s7 = scalar_select 0, %s6, %s4
  $region1: #{simple_classifier_forward.1} parent=0
    #allocation2 [shape = 'u8[4096]{0}', space=vmem, size = 0x1000, scoped, tag = 'input window, operand 0, single buffered']
    #allocation3 [shape = 's32[1]{0}', space=sflag, size = 0x4, scoped, tag = 'scoped memory for simple_classifier_forward.1']
    #allocation4 [shape = 'u8[16384]{0}', space=vmem, size = 0x4000, scoped, tag = 'input window, operand 1, single buffered']
    #allocation5 [shape = 's32[1]{0}', space=sflag, size = 0x4, scoped, tag = 'scoped memory for simple_classifier_forward.1']
    %8 = vsyncpa [#allocation3], 0
    %9 = vsyncpa [#allocation5], 0
    // Predicated region
    $region2: #{simple_classifier_forward.1} parent=1 // pred_check
      _
    $region3: #{simple_classifier_forward.1} parent=1 // pred_check_branch
      %11 = sbr.rel (0) target = $region5
    $region4: #{simple_classifier_forward.1} parent=1 // pred_region
      %13 = vsyncadd [#allocation3], 0
      %s15 = sshll.u32 %s0, 4
      %s16 = int_to_ptr.hbm [resolvable:$true] %s15
      %s17 = sshll.u32 [#allocation2], 4
      %s18 = int_to_ptr.vmem [resolvable:$true] %s17
      %20 = dma.hbm_to_vmem [thread:$0]  %s16, 128, %s18, [#allocation3]
    $region5: #{simple_classifier_forward.1} parent=1 // pred_fallthru
      _
    // Predicated region
    $region6: #{simple_classifier_forward.1} parent=1 // pred_check
      _
    $region7: #{simple_classifier_forward.1} parent=1 // pred_check_branch
      %22 = sbr.rel (0) target = $region9
    $region8: #{simple_classifier_forward.1} parent=1 // pred_region
      %24 = vsyncadd [#allocation5], 0
      %s25 = sshll.u32 %s1, 4
      %s26 = int_to_ptr.hbm [resolvable:$true] %s25
      %s27 = sshll.u32 [#allocation4], 4
      %s28 = int_to_ptr.vmem [resolvable:$true] %s27
      %33 = dma.hbm_to_vmem [thread:$0]  %s26, 512, %s28, [#allocation5], 128, 128, 8
    $region9: #{simple_classifier_forward.1} parent=1 // pred_fallthru
      _
    // Predicated region
    $region10: #{simple_classifier_forward.1} parent=1 // pred_check
      _
    $region11: #{simple_classifier_forward.1} parent=1 // pred_check_branch
      %35 = sbr.rel (0) target = $region13
    $region12: #{simple_classifier_forward.1} parent=1 // pred_region
      _
    $region13: #{simple_classifier_forward.1} parent=1 // pred_fallthru
      _
    // Predicated region
    $region14: #{simple_classifier_forward.1} parent=1 // pred_check
      _
    $region15: #{simple_classifier_forward.1} parent=1 // pred_check_branch
      %37 = sbr.rel (0) target = $region17
    $region16: #{simple_classifier_forward.1} parent=1 // pred_region
      %39 = dma.done [#allocation3], 128
    $region17: #{simple_classifier_forward.1} parent=1 // pred_fallthru
      _
    // Predicated region
    $region18: #{simple_classifier_forward.1} parent=1 // pred_check
      _
    $region19: #{simple_classifier_forward.1} parent=1 // pred_check_branch
      %41 = sbr.rel (0) target = $region21
    $region20: #{simple_classifier_forward.1} parent=1 // pred_region
      %43 = dma.done [#allocation5], 512
    $region21: #{simple_classifier_forward.1} parent=1 // pred_fallthru
      _
    %v44 = vld [vmem:[#allocation2] sm:$0xff]
    %v45 = vld [vmem:[#allocation4] sm:$0xff]
    %v46 = vld [vmem:[#allocation4 + $0x8] sm:$0xff]
    %v47 = vld [vmem:[#allocation4 + $0x10] sm:$0xff]
    %v48 = vld [vmem:[#allocation4 + $0x18] sm:$0xff]
    %v49 = vld [vmem:[%s2] sm:$0x1]
    %v51 = vperm.slane %v49, 0
    %vm53 = vcmask 261120
    %v55 = vsel %vm53, %v44, 0
    %57 = vmatpush.msra.mxu0 0.0
    %58 = vmatpush.msra.mxu0 0.0
    %59 = vmatpush.msra.mxu0 0.0
    %60 = vmatpush.msra.mxu0 0.0
    %61 = vmatpush.msra.mxu0 0.0
    %62 = vmatpush.msra.mxu0 0.0
    %63 = vmatpush.msra.mxu0 0.0
    %64 = vmatpush.msra.mxu0 0.0
    %65 = vmatpush.msra.mxu0 0.0
    %66 = vmatpush.msra.mxu0 0.0
    %67 = vmatpush.msra.mxu0 0.0
    %68 = vmatpush.msra.mxu0 0.0
    %69 = vmatpush.msra.mxu0 %v48
    %70 = vmatpush.msra.mxu0 %v47
    %71 = vmatpush.msra.mxu0 %v46
    %72 = vmatpush.msra.mxu0 %v45
    %73 = vmatmul.f32.gmra.mxu0 %v55
    %v74 = vpop.f32.mrf.mxu0
    %v75 = vadd.f32 %v51, %v74
    %76 = vdwg.mxu0
    %77 = vst [vmem:[%s3] sm:$0xff] %v75
    // Predicated region
    $region22: #{simple_classifier_forward.1} parent=1 // pred_check
      _
    $region23: #{simple_classifier_forward.1} parent=1 // pred_check_branch
      %79 = sbr.rel (0) target = $region25
    $region24: #{simple_classifier_forward.1} parent=1 // pred_region
      _
    $region25: #{simple_classifier_forward.1} parent=1 // pred_fallthru
      _
    // Predicated region
    $region26: #{simple_classifier_forward.1} parent=1 // pred_check
      _
    $region27: #{simple_classifier_forward.1} parent=1 // pred_check_branch
      %81 = sbr.rel (0) target = $region29
    $region28: #{simple_classifier_forward.1} parent=1 // pred_region
      _
    $region29: #{simple_classifier_forward.1} parent=1 // pred_fallthru
      _
    %82 = vsyncpa [#allocation3], 1
    %83 = vsyncpa [#allocation5], 1

</llo_original>
